<compile_context>
chip_gen: v6e
topology: v6e:2x2x1
jax: 0.10.0
libtpu: 0.0.40
codegen_flags: <defaults>
</compile_context>

<pallas_src>
import functools

import jax
import jax.numpy as jnp
from jax import lax
from jax.experimental import pallas as pl
from jax.experimental.pallas import tpu as pltpu

_H_CHUNK = 512  # lanes per partial-reduce chunk (multiple of 128)


def _value_head_kernel(x_ref, w_ref, b_ref, o_ref, *, apply_tanh: bool):
    # x_ref: (tm, H) VMEM (input dtype), w_ref: (1, H) VMEM (input dtype),
    # b_ref: (1,) SMEM f32, o_ref: (tm, 1) VMEM (input dtype).
    tm, H = x_ref.shape
    n_full = H // _H_CHUNK
    rem = H % _H_CHUNK

    def partial_sum(xs, ws):
        # Multiply in the input dtype (bf16 VALU on v6e/v7x); accumulate the
        # lane reduce in f32.  Bounds the f32 temp to (tm, _H_CHUNK).
        return jnp.sum((xs * ws).astype(jnp.float32), axis=-1, keepdims=True)

    acc = jnp.zeros((tm, 1), jnp.float32)
    if n_full > 0:
        def body(c, a):
            s = pl.multiple_of(c * _H_CHUNK, _H_CHUNK)
            return a + partial_sum(x_ref[:, pl.ds(s, _H_CHUNK)],
                                   w_ref[:, pl.ds(s, _H_CHUNK)])
        acc = lax.fori_loop(0, n_full, body, acc, unroll=True)
    if rem > 0:
        acc = acc + partial_sum(x_ref[:, n_full * _H_CHUNK:],
                                w_ref[:, n_full * _H_CHUNK:])

    out = acc + b_ref[0]                      # scalar bias from SMEM
    if apply_tanh:
        out = jnp.tanh(out)                   # EUP
    o_ref[...] = out.astype(o_ref.dtype)


def _round_up(v, m):
    return -(-v // m) * m


def _pick_row_tile(M, H, itemsize):
    """Sublane-aligned row tile: VMEM-budgeted, ~4 grid steps, >=~2 MiB/step."""
    sublane = 16 if itemsize <= 2 else 8
    m_ceil = _round_up(M, sublane)
    row_bytes = H * itemsize

    # Largest tile under a ~14 MiB total double-buffered x slab.
    budget = 14 * 1024 * 1024
    tm_max = (budget // (2 * row_bytes)) // sublane * sublane
    tm_max = int(min(2048, max(sublane, tm_max), m_ceil))

    # Tile giving ~4 grid steps (>= 2 per v7x TensorCore => pipelined).
    tm_4 = _round_up(-(-m_ceil // 4), sublane)
    # Per-step floor of ~2 MiB of x so each DMA stays near HBM roofline.
    tm_floor = min(tm_max,
                   max(sublane, ((2 * 1024 * 1024) // row_bytes) // sublane * sublane))

    return max(tm_floor, min(tm_max, tm_4))


def value_head_forward(hidden_states, weight, bias, *, apply_tanh=True, tm=None):
    """hidden_states: (B, S, H).  weight: (1, H) (PyTorch nn.Linear layout).
    bias: (1,).  Returns (B, S, 1), matching nn.Linear(hidden, 1) (+ tanh)."""
    B, S, H = hidden_states.shape
    M = B * S
    dtype = hidden_states.dtype
    itemsize = jnp.dtype(dtype).itemsize
    sublane = 16 if itemsize <= 2 else 8

    x2d = hidden_states.reshape(M, H)
    w = weight.reshape(1, H)                  # lane-dense; no transpose, no cast
    b = bias.reshape(1).astype(jnp.float32)   # scalar -> SMEM

    if tm is None:
        tm = _pick_row_tile(M, H, itemsize)
    assert tm % sublane == 0, f"tm={tm} must be a multiple of {sublane}"

    # No jnp.pad: Pallas clips the ragged last block's reads and writes.
    grid = pl.cdiv(M, tm)

    kernel = functools.partial(_value_head_kernel, apply_tanh=apply_tanh)

    cost = pl.CostEstimate(
        flops=2 * M * H,
        transcendentals=M if apply_tanh else 0,
        bytes_accessed=M * H * itemsize + H * itemsize + M * itemsize,
    )

    out2d = pl.pallas_call(
        kernel,
        out_shape=jax.ShapeDtypeStruct((M, 1), dtype),
        grid_spec=pltpu.PrefetchScalarGridSpec(
            num_scalar_prefetch=0,
            grid=(grid,),
            in_specs=[
                pl.BlockSpec((tm, H), lambda i: (i, 0)),    # row tile of activations
                pl.BlockSpec((1, H), lambda i: (0, 0)),     # lane-dense weight (DMA'd once)
                pl.BlockSpec(memory_space=pltpu.MemorySpace.SMEM),  # bias scalar
            ],
            out_specs=pl.BlockSpec((tm, 1), lambda i: (i, 0)),
        ),
        compiler_params=pltpu.CompilerParams(
            dimension_semantics=("parallel",),
            vmem_limit_bytes=40 * 1024 * 1024,
        ),
        cost_estimate=cost,
    )(x2d, w, b)

    return out2d.reshape(B, S, 1)


def value_head_reference(hidden_states, weight, bias, *, apply_tanh=True):
    out = jnp.einsum("bsh,oh->bso", hidden_states.astype(jnp.float32),
                     weight.astype(jnp.float32)) + bias.astype(jnp.float32)
    if apply_tanh:
        out = jnp.tanh(out)
    return out.astype(hidden_states.dtype)


if __name__ == "__main__":
    key = jax.random.PRNGKey(0)
    k_x, k_w, k_b, k_x2, k_w2, k_b2 = jax.random.split(key, 6)

    # Case 1: small shapes consistent with the module: batch=2, seq=8, hidden=32.
    B, S, H = 2, 8, 32
    hidden_states = jax.random.normal(k_x, (B, S, H), dtype=jnp.float32)
    weight = jax.random.normal(k_w, (1, H), dtype=jnp.float32) * 0.02
    bias = jax.random.normal(k_b, (1,), dtype=jnp.float32) * 0.02

    out = value_head_forward(hidden_states, weight, bias, apply_tanh=True)
    out = jax.block_until_ready(out)
    ref = value_head_reference(hidden_states, weight, bias, apply_tanh=True)
    assert out.shape == (B, S, 1), out.shape
    assert jnp.allclose(out, ref, atol=1e-5, rtol=1e-5), "mismatch vs reference (case 1)"

    # Case 2: ragged row count (M not a multiple of tm) exercises the
    # no-padding edge-block path.
    B2, S2, H2 = 2, 13, 128
    hs2 = jax.random.normal(k_x2, (B2, S2, H2), dtype=jnp.float32)
    w2 = jax.random.normal(k_w2, (1, H2), dtype=jnp.float32) * 0.02
    b2 = jax.random.normal(k_b2, (1,), dtype=jnp.float32) * 0.02

    out2 = value_head_forward(hs2, w2, b2, apply_tanh=True, tm=8)
    out2 = jax.block_until_ready(out2)
    ref2 = value_head_reference(hs2, w2, b2, apply_tanh=True)
    assert out2.shape == (B2, S2, 1), out2.shape
    assert jnp.allclose(out2, ref2, atol=1e-5, rtol=1e-5), "mismatch vs reference (case 2)"

    print("KERNEL_OK")
</pallas_src>

<mosaic_0001>
module attributes {stable_mosaic.version = 11 : i64} {
  func.func @_value_head_kernel(%arg0: i32, %arg1: memref<16x32xf32, #tpu.memory_space<vmem>>, %arg2: memref<1x32xf32, #tpu.memory_space<vmem>>, %arg3: memref<1xf32, #tpu.memory_space<smem>>, %arg4: memref<16x1xf32, #tpu.memory_space<vmem>>) attributes {dimension_semantics = [#tpu.dimension_semantics<parallel>], iteration_bounds = array<i64: 1>, scalar_prefetch = 0 : i64, scratch_operands = 0 : i64, tpu.core_type = #tpu.core_type<tc>, window_params = [{transform_indices = @transform_0, window_bounds = array<i64: 16, 32>}, {pipeline_mode = #tpu.pipeline_mode<synchronous>, transform_indices = @transform_1, window_bounds = array<i64: 1, 32>}, {transform_indices = @transform_2, window_bounds = array<i64: 1>}, {transform_indices = @transform_3, window_bounds = array<i64: 16, 1>}]} {
    %cst = arith.constant 0.000000e+00 : f32
    %0 = vector.broadcast %cst : f32 to vector<16x1xf32>
    %c0 = arith.constant 0 : index
    %c0_0 = arith.constant 0 : index
    %1 = vector.load %arg1[%c0, %c0_0] : memref<16x32xf32, #tpu.memory_space<vmem>>, vector<16x32xf32>
    %c0_1 = arith.constant 0 : index
    %c0_2 = arith.constant 0 : index
    %2 = vector.load %arg2[%c0_1, %c0_2] : memref<1x32xf32, #tpu.memory_space<vmem>>, vector<1x32xf32>
    %3 = vector.broadcast %2 : vector<1x32xf32> to vector<16x32xf32>
    %4 = arith.mulf %1, %3 : vector<16x32xf32>
    %cst_3 = arith.constant dense<0.000000e+00> : vector<16xf32>
    %5 = vector.multi_reduction <add>, %4, %cst_3 [1] : vector<16x32xf32> to vector<16xf32>
    %6 = vector.shape_cast %5 : vector<16xf32> to vector<16x1xf32>
    %7 = arith.addf %0, %6 : vector<16x1xf32>
    %c0_4 = arith.constant 0 : index
    %8 = memref.load %arg3[%c0_4] : memref<1xf32, #tpu.memory_space<smem>>
    %9 = vector.broadcast %8 : f32 to vector<16x1xf32>
    %10 = arith.addf %7, %9 : vector<16x1xf32>
    %11 = math.tanh %10 : vector<16x1xf32>
    %c0_5 = arith.constant 0 : index
    %c0_6 = arith.constant 0 : index
    %12 = vector.load %arg4[%c0_5, %c0_6] : memref<16x1xf32, #tpu.memory_space<vmem>>, vector<16x1xf32>
    tpu.vector_store %arg4[%c0_5, %c0_6], %11 {strides = array<i32>} : memref<16x1xf32, #tpu.memory_space<vmem>>, vector<16x1xf32>,
    return
  }
  func.func @transform_0(%arg0: i32) -> (i32, i32) {
    %c0_i32 = arith.constant 0 : i32
    %c0_i32_0 = arith.constant 0 : i32
    return %arg0, %c0_i32 : i32, i32
  }
  func.func @transform_1(%arg0: i32) -> (i32, i32) {
    %c0_i32 = arith.constant 0 : i32
    %c0_i32_0 = arith.constant 0 : i32
    %c0_i32_1 = arith.constant 0 : i32
    return %c0_i32, %c0_i32_0 : i32, i32
  }
  func.func @transform_2(%arg0: i32) -> i32 {
    %c0_i32 = arith.constant 0 : i32
    %c0_i32_0 = arith.constant 0 : i32
    return %c0_i32 : i32
  }
  func.func @transform_3(%arg0: i32) -> (i32, i32) {
    %c0_i32 = arith.constant 0 : i32
    %c0_i32_0 = arith.constant 0 : i32
    return %arg0, %c0_i32 : i32, i32
  }
}

</mosaic_0001>

<llo_original>
// kernel: tpu_custom_call.1
$region0: #{tpu_custom_call.1}
  #allocation0 [shape = 'u32[]', space=smem, size = 0x4, offset = 0x4, fixed_abs, tag = 'smem constant byte address 0x4 - core index']
  #allocation1 [shape = 'u32[144,128]{1,0:T(1,128)}', space=vmem, size = 0x12000, scoped, tag = 'internal scratch']
  #allocation2 [shape = 'f32[1]{0:T(128)S(6)}', space=smem, size = 0x200, scoped, tag = 'scoped memory for tpu_custom_call.1']
  %s0 = inlined_call_operand.hbm [shape: f32[16,32], index: 0, kind: input, shape index: {}]
  %s1 = inlined_call_operand.vmem [shape: f32[1,32], index: 1, kind: input, shape index: {}]
  %s2 = inlined_call_operand.<no memory space> [shape: f32[1], index: 2, kind: input, shape index: {}]
  %s3 = inlined_call_operand.vmem [shape: f32[16,1], index: 3, kind: output, shape index: {}]
  %s4 = sld [smem:[#allocation0]]
  $region26: #{tpu_custom_call.1} parent=0
    _
  %s6 = ssub.s32 1, %s4
  %s7 = scalar_select 0, %s6, %s4
  %8 = sst [smem:[#allocation2]] %s2
  $region1: #{tpu_custom_call.1} parent=0
    #allocation3 [shape = 'u8[8192]{0}', space=vmem, size = 0x2000, scoped, tag = 'input window, operand 0, single buffered']
    #allocation4 [shape = 's32[1]{0}', space=sflag, size = 0x4, scoped, tag = 'scoped memory for tpu_custom_call.1']
    %9 = vsyncpa [#allocation4], 0
    // Predicated region
    $region2: #{tpu_custom_call.1} parent=1 // pred_check
      _
    $region3: #{tpu_custom_call.1} parent=1 // pred_check_branch
      %11 = sbr.rel (0) target = $region5
    $region4: #{tpu_custom_call.1} parent=1 // pred_region
      %s13 = ssub.s32 256, 256
      %14 = vsyncadd [#allocation4], %s13
      %s15 = sshll.u32 [#allocation3], 4
      %s16 = int_to_ptr.vmem [resolvable:$true] %s15
      %21 = dma.hbm_to_vmem [thread:$0]  %s0, 256, %s16, [#allocation4], 128, 128, 8
    $region5: #{tpu_custom_call.1} parent=1 // pred_fallthru
      _
    // Predicated region
    $region6: #{tpu_custom_call.1} parent=1 // pred_check
      _
    $region7: #{tpu_custom_call.1} parent=1 // pred_check_branch
      %23 = sbr.rel (0) target = $region9
    $region8: #{tpu_custom_call.1} parent=1 // pred_region
      _
    $region9: #{tpu_custom_call.1} parent=1 // pred_fallthru
      _
    // Predicated region
    $region10: #{tpu_custom_call.1} parent=1 // pred_check
      _
    $region11: #{tpu_custom_call.1} parent=1 // pred_check_branch
      %25 = sbr.rel (0) target = $region13
    $region12: #{tpu_custom_call.1} parent=1 // pred_region
      _
    $region13: #{tpu_custom_call.1} parent=1 // pred_fallthru
      _
    // Predicated region
    $region14: #{tpu_custom_call.1} parent=1 // pred_check
      _
    $region15: #{tpu_custom_call.1} parent=1 // pred_check_branch
      %27 = sbr.rel (0) target = $region17
    $region16: #{tpu_custom_call.1} parent=1 // pred_region
      %28 = dma.done [#allocation4], 256
    $region17: #{tpu_custom_call.1} parent=1 // pred_fallthru
      _
    %v29 = vld [vmem:[#allocation3] sm:$0xff]
    %v30 = vld [vmem:[#allocation3 + $0x8] sm:$0xff]
    %v31 = vld [vmem:[%s1] sm:$0x1]
    %v33 = vlaneseq
    %v34 = vshrl.u32 %v33, 7
    %v35 = vsub.s32 0, %v34
    %v36 = vrot.slane %v31, %v35
    %v38 = vmul.f32 %v29, %v36
    %v39 = vmul.f32 %v30, %v36
    %vm40 = vcmask 261120
    %v41 = vsel %vm40, %v38, 0.0
    %42 = vadd.xlane.f32.xlu0 %v41
    %v43 = vpop.xlane.xlu0 %42
    %v44 = vsel %vm40, %v39, 0.0
    %45 = vadd.xlane.f32.xlu0 %v44
    %v46 = vpop.xlane.xlu0 %45
    %v47 = vadd.f32 %v43, 0.0
    %v48 = vadd.f32 %v46, 0.0
    %s49 = sld [smem:[#allocation2]]
    %v50 = vstv %s49
    %v51 = vadd.f32 %v47, %v50
    %v52 = vadd.f32 %v48, %v50
    %v53 = vtanh.pop %v51
    %v54 = vtanh.pop %v52
    %vm55 = vcmask 7168
    %56 = vst.msk [vmem:[%s3] sm:$0xff] %vm55, %v53
    %57 = vst.msk [vmem:[%s3 + $0x8] sm:$0xff] %vm55, %v54
    // Predicated region
    $region18: #{tpu_custom_call.1} parent=1 // pred_check
      _
    $region19: #{tpu_custom_call.1} parent=1 // pred_check_branch
      %59 = sbr.rel (0) target = $region21
    $region20: #{tpu_custom_call.1} parent=1 // pred_region
      _
    $region21: #{tpu_custom_call.1} parent=1 // pred_fallthru
      _
    // Predicated region
    $region22: #{tpu_custom_call.1} parent=1 // pred_check
      _
    $region23: #{tpu_custom_call.1} parent=1 // pred_check_branch
      %61 = sbr.rel (0) target = $region25
    $region24: #{tpu_custom_call.1} parent=1 // pred_region
      _
    $region25: #{tpu_custom_call.1} parent=1 // pred_fallthru
      _
    %62 = vsyncpa [#allocation4], 1

</llo_original>
